<compile_context>
chip_gen: v5e
topology: v5e:2x2
jax: 0.10.0
libtpu: 0.0.40
codegen_flags: <defaults>
</compile_context>

<pallas_src>
import numpy as np
import jax
import jax.numpy as jnp
from jax.experimental import pallas as pl
from jax.experimental.pallas import tpu as pltpu


def _round_up(x, m):
    return ((x + m - 1) // m) * m


# ----------------------------------------------------------------------------
# Kernel factory: fused  sigmoid( relu(x @ W1 + b1) @ W2 + b2 )  as VPU FMAs,
# with the tiny head baked in as compile-time scalar constants.
# ----------------------------------------------------------------------------
def _make_saliency_kernel(w1, b1, w2, b2):
    """w1: (C_in, HID) nested list of floats; b1, w2: length-HID lists; b2: float."""
    c_in = len(w1)
    hid = len(b1)

    def kernel(x_ref, o_ref):
        # x_ref: (1, C_in, TILE)  -- channels in sublanes, pixels in lanes
        # o_ref: (1, 1, TILE)     -- lane-dense output
        x = x_ref[0]                                     # (C_in, TILE)
        chans = [x[c:c + 1, :] for c in range(c_in)]     # each (1, TILE)
        acc = jnp.full_like(chans[0], b2)
        for j in range(hid):                             # fully unrolled
            h = chans[0] * w1[0][j]
            for c in range(1, c_in):
                h = h + chans[c] * w1[c][j]
            h = jnp.maximum(h + b1[j], 0.0)
            acc = acc + h * w2[j]
        o_ref[0] = jax.nn.sigmoid(acc)

    return kernel


# ----------------------------------------------------------------------------
# pallas_call wrapper: (N, C, P) -> (N, 1, P)
# ----------------------------------------------------------------------------
def saliency_map_pallas(x_ncp, kernel, *, c_in, max_tile=32768):
    N, C, P = x_ncp.shape
    assert C == c_in

    tile = min(max_tile, _round_up(P, 128))     # lane-aligned tile
    p_pad = _round_up(P, tile)
    if p_pad != P:
        x_ncp = jnp.pad(x_ncp, ((0, 0), (0, 0), (0, p_pad - P)))

    grid = (N, p_pad // tile)
    out = pl.pallas_call(
        kernel,
        out_shape=jax.ShapeDtypeStruct((N, 1, p_pad), jnp.float32),
        grid_spec=pltpu.PrefetchScalarGridSpec(
            num_scalar_prefetch=0,
            grid=grid,
            in_specs=[pl.BlockSpec((1, c_in, tile), lambda n, t: (n, 0, t))],
            out_specs=pl.BlockSpec((1, 1, tile), lambda n, t: (n, 0, t)),
        ),
        compiler_params=pltpu.CompilerParams(
            dimension_semantics=("parallel", "parallel"),
        ),
    )(x_ncp)

    if p_pad != P:
        out = out[:, :, :P]
    return out


# ----------------------------------------------------------------------------
# Wrapper mirroring BackGroundRemover.forward(x) with type='map'
# ----------------------------------------------------------------------------
class BackGroundRemoverPallas:
    def __init__(self, hidden=32, c_in=3, seed=0):
        # Deterministic synthetic parameters (stand-in for the pretrained
        # InSPyReNet checkpoint).
        key = jax.random.PRNGKey(seed)
        k1, k2 = jax.random.split(key)
        self.w1 = np.asarray(jax.random.normal(k1, (c_in, hidden), jnp.float32)) * np.float32(0.1)
        self.b1 = np.zeros((hidden,), np.float32)
        self.w2 = np.asarray(jax.random.normal(k2, (hidden,), jnp.float32)) * np.float32(0.1)
        self.b2 = np.float32(0.0)
        self.c_in = c_in
        # Bake the head into the kernel as scalar constants.
        self._kernel = _make_saliency_kernel(
            [[float(self.w1[c, j]) for j in range(hidden)] for c in range(c_in)],
            [float(v) for v in self.b1],
            [float(v) for v in self.w2],
            float(self.b2),
        )

    def __call__(self, x_nchw):
        # x_nchw: (N, C, H, W) float32  ->  (N, 1, H, W) saliency map in [0, 1]
        N, C, H, W = x_nchw.shape
        assert C == self.c_in
        x3 = x_nchw.reshape(N, C, H * W)               # free reshape, no transpose
        out3 = saliency_map_pallas(x3, self._kernel, c_in=self.c_in)
        return out3.reshape(N, 1, H, W)                # free reshape, no transpose

    # Pure-JAX reference of the same head (for correctness checking only).
    def reference(self, x_nchw):
        N, C, H, W = x_nchw.shape
        x_pix = jnp.transpose(x_nchw, (0, 2, 3, 1)).reshape(N * H * W, C)
        h = jnp.maximum(x_pix @ jnp.asarray(self.w1) + jnp.asarray(self.b1), 0.0)
        logits = h @ jnp.asarray(self.w2)[:, None] + jnp.asarray(self.b2)
        out = jax.nn.sigmoid(logits)
        return jnp.transpose(out.reshape(N, H, W, 1), (0, 3, 1, 2))


if __name__ == "__main__":
    key = jax.random.PRNGKey(0)
    # Small RGB image batch consistent with the module's input: (N=2, C=3, H=16, W=16)
    x = jax.random.uniform(key, (2, 3, 16, 16), dtype=jnp.float32)

    model = BackGroundRemoverPallas(hidden=32, c_in=3, seed=0)
    out = jax.block_until_ready(model(x))

    assert out.shape == (2, 1, 16, 16), out.shape
    assert out.dtype == jnp.float32
    assert bool(jnp.all((out >= 0.0) & (out <= 1.0)))

    ref = jax.block_until_ready(model.reference(x))
    assert bool(jnp.allclose(out, ref, atol=1e-5, rtol=1e-5))

    print("KERNEL_OK")
</pallas_src>

<mosaic_0001>
module attributes {stable_mosaic.version = 11 : i64} {
  func.func @kernel(%arg0: i32, %arg1: i32, %arg2: memref<1x3x256xf32, #tpu.memory_space<vmem>>, %arg3: memref<1x1x256xf32, #tpu.memory_space<vmem>>) attributes {dimension_semantics = [#tpu.dimension_semantics<parallel>, #tpu.dimension_semantics<parallel>], iteration_bounds = array<i64: 2, 1>, scalar_prefetch = 0 : i64, scratch_operands = 0 : i64, tpu.core_type = #tpu.core_type<tc>, window_params = [{transform_indices = @transform_0, window_bounds = array<i64: 1, 3, 256>}, {transform_indices = @transform_1, window_bounds = array<i64: 1, 1, 256>}]} {
    %c0 = arith.constant 0 : index
    %c0_0 = arith.constant 0 : index
    %c0_1 = arith.constant 0 : index
    %0 = vector.load %arg2[%c0, %c0_0, %c0_1] : memref<1x3x256xf32, #tpu.memory_space<vmem>>, vector<1x3x256xf32>
    %1 = vector.shape_cast %0 : vector<1x3x256xf32> to vector<3x256xf32>
    %2 = vector.extract_strided_slice %1 {offsets = [0, 0], sizes = [1, 256], strides = [1, 1]} : vector<3x256xf32> to vector<1x256xf32>
    %3 = vector.extract_strided_slice %1 {offsets = [1, 0], sizes = [1, 256], strides = [1, 1]} : vector<3x256xf32> to vector<1x256xf32>
    %4 = vector.extract_strided_slice %1 {offsets = [2, 0], sizes = [1, 256], strides = [1, 1]} : vector<3x256xf32> to vector<1x256xf32>
    %cst = arith.constant 0.000000e+00 : f32
    %5 = vector.broadcast %cst : f32 to vector<1x256xf32>
    %cst_2 = arith.constant 0.100401424 : f32
    %6 = vector.broadcast %cst_2 : f32 to vector<1x256xf32>
    %7 = arith.mulf %2, %6 : vector<1x256xf32>
    %cst_3 = arith.constant -0.058871638 : f32
    %8 = vector.broadcast %cst_3 : f32 to vector<1x256xf32>
    %9 = arith.mulf %3, %8 : vector<1x256xf32>
    %10 = arith.addf %7, %9 : vector<1x256xf32>
    %cst_4 = arith.constant -0.248331025 : f32
    %11 = vector.broadcast %cst_4 : f32 to vector<1x256xf32>
    %12 = arith.mulf %4, %11 : vector<1x256xf32>
    %13 = arith.addf %10, %12 : vector<1x256xf32>
    %cst_5 = arith.constant 0.000000e+00 : f32
    %14 = vector.broadcast %cst_5 : f32 to vector<1x256xf32>
    %15 = arith.addf %13, %14 : vector<1x256xf32>
    %cst_6 = arith.constant 0.000000e+00 : f32
    %16 = vector.broadcast %cst_6 : f32 to vector<1x256xf32>
    %17 = arith.maximumf %15, %16 : vector<1x256xf32>
    %cst_7 = arith.constant -0.244245574 : f32
    %18 = vector.broadcast %cst_7 : f32 to vector<1x256xf32>
    %19 = arith.mulf %17, %18 : vector<1x256xf32>
    %20 = arith.addf %5, %19 : vector<1x256xf32>
    %cst_8 = arith.constant -0.0906337201 : f32
    %21 = vector.broadcast %cst_8 : f32 to vector<1x256xf32>
    %22 = arith.mulf %2, %21 : vector<1x256xf32>
    %cst_9 = arith.constant 0.214698508 : f32
    %23 = vector.broadcast %cst_9 : f32 to vector<1x256xf32>
    %24 = arith.mulf %3, %23 : vector<1x256xf32>
    %25 = arith.addf %22, %24 : vector<1x256xf32>
    %cst_10 = arith.constant -0.0714963898 : f32
    %26 = vector.broadcast %cst_10 : f32 to vector<1x256xf32>
    %27 = arith.mulf %4, %26 : vector<1x256xf32>
    %28 = arith.addf %25, %27 : vector<1x256xf32>
    %cst_11 = arith.constant 0.000000e+00 : f32
    %29 = vector.broadcast %cst_11 : f32 to vector<1x256xf32>
    %30 = arith.addf %28, %29 : vector<1x256xf32>
    %cst_12 = arith.constant 0.000000e+00 : f32
    %31 = vector.broadcast %cst_12 : f32 to vector<1x256xf32>
    %32 = arith.maximumf %30, %31 : vector<1x256xf32>
    %cst_13 = arith.constant -0.203568056 : f32
    %33 = vector.broadcast %cst_13 : f32 to vector<1x256xf32>
    %34 = arith.mulf %32, %33 : vector<1x256xf32>
    %35 = arith.addf %20, %34 : vector<1x256xf32>
    %cst_14 = arith.constant -0.0748172253 : f32
    %36 = vector.broadcast %cst_14 : f32 to vector<1x256xf32>
    %37 = arith.mulf %2, %36 : vector<1x256xf32>
    %cst_15 = arith.constant 0.0801880359 : f32
    %38 = vector.broadcast %cst_15 : f32 to vector<1x256xf32>
    %39 = arith.mulf %3, %38 : vector<1x256xf32>
    %40 = arith.addf %37, %39 : vector<1x256xf32>
    %cst_16 = arith.constant -0.01874304 : f32
    %41 = vector.broadcast %cst_16 : f32 to vector<1x256xf32>
    %42 = arith.mulf %4, %41 : vector<1x256xf32>
    %43 = arith.addf %40, %42 : vector<1x256xf32>
    %cst_17 = arith.constant 0.000000e+00 : f32
    %44 = vector.broadcast %cst_17 : f32 to vector<1x256xf32>
    %45 = arith.addf %43, %44 : vector<1x256xf32>
    %cst_18 = arith.constant 0.000000e+00 : f32
    %46 = vector.broadcast %cst_18 : f32 to vector<1x256xf32>
    %47 = arith.maximumf %45, %46 : vector<1x256xf32>
    %cst_19 = arith.constant 0.0205544233 : f32
    %48 = vector.broadcast %cst_19 : f32 to vector<1x256xf32>
    %49 = arith.mulf %47, %48 : vector<1x256xf32>
    %50 = arith.addf %35, %49 : vector<1x256xf32>
    %cst_20 = arith.constant -0.117136694 : f32
    %51 = vector.broadcast %cst_20 : f32 to vector<1x256xf32>
    %52 = arith.mulf %2, %51 : vector<1x256xf32>
    %cst_21 = arith.constant -0.0197454281 : f32
    %53 = vector.broadcast %cst_21 : f32 to vector<1x256xf32>
    %54 = arith.mulf %3, %53 : vector<1x256xf32>
    %55 = arith.addf %52, %54 : vector<1x256xf32>
    %cst_22 = arith.constant 0.23848474 : f32
    %56 = vector.broadcast %cst_22 : f32 to vector<1x256xf32>
    %57 = arith.mulf %4, %56 : vector<1x256xf32>
    %58 = arith.addf %55, %57 : vector<1x256xf32>
    %cst_23 = arith.constant 0.000000e+00 : f32
    %59 = vector.broadcast %cst_23 : f32 to vector<1x256xf32>
    %60 = arith.addf %58, %59 : vector<1x256xf32>
    %cst_24 = arith.constant 0.000000e+00 : f32
    %61 = vector.broadcast %cst_24 : f32 to vector<1x256xf32>
    %62 = arith.maximumf %60, %61 : vector<1x256xf32>
    %cst_25 = arith.constant -0.0353550203 : f32
    %63 = vector.broadcast %cst_25 : f32 to vector<1x256xf32>
    %64 = arith.mulf %62, %63 : vector<1x256xf32>
    %65 = arith.addf %50, %64 : vector<1x256xf32>
    %cst_26 = arith.constant -0.0871232822 : f32
    %66 = vector.broadcast %cst_26 : f32 to vector<1x256xf32>
    %67 = arith.mulf %2, %66 : vector<1x256xf32>
    %cst_27 = arith.constant -0.173980489 : f32
    %68 = vector.broadcast %cst_27 : f32 to vector<1x256xf32>
    %69 = arith.mulf %3, %68 : vector<1x256xf32>
    %70 = arith.addf %67, %69 : vector<1x256xf32>
    %cst_28 = arith.constant -0.179603979 : f32
    %71 = vector.broadcast %cst_28 : f32 to vector<1x256xf32>
    %72 = arith.mulf %4, %71 : vector<1x256xf32>
    %73 = arith.addf %70, %72 : vector<1x256xf32>
    %cst_29 = arith.constant 0.000000e+00 : f32
    %74 = vector.broadcast %cst_29 : f32 to vector<1x256xf32>
    %75 = arith.addf %73, %74 : vector<1x256xf32>
    %cst_30 = arith.constant 0.000000e+00 : f32
    %76 = vector.broadcast %cst_30 : f32 to vector<1x256xf32>
    %77 = arith.maximumf %75, %76 : vector<1x256xf32>
    %cst_31 = arith.constant -0.0761974081 : f32
    %78 = vector.broadcast %cst_31 : f32 to vector<1x256xf32>
    %79 = arith.mulf %77, %78 : vector<1x256xf32>
    %80 = arith.addf %65, %79 : vector<1x256xf32>
    %cst_32 = arith.constant 0.0588838123 : f32
    %81 = vector.broadcast %cst_32 : f32 to vector<1x256xf32>
    %82 = arith.mulf %2, %81 : vector<1x256xf32>
    %cst_33 = arith.constant -0.0821419134 : f32
    %83 = vector.broadcast %cst_33 : f32 to vector<1x256xf32>
    %84 = arith.mulf %3, %83 : vector<1x256xf32>
    %85 = arith.addf %82, %84 : vector<1x256xf32>
    %cst_34 = arith.constant -0.103631258 : f32
    %86 = vector.broadcast %cst_34 : f32 to vector<1x256xf32>
    %87 = arith.mulf %4, %86 : vector<1x256xf32>
    %88 = arith.addf %85, %87 : vector<1x256xf32>
    %cst_35 = arith.constant 0.000000e+00 : f32
    %89 = vector.broadcast %cst_35 : f32 to vector<1x256xf32>
    %90 = arith.addf %88, %89 : vector<1x256xf32>
    %cst_36 = arith.constant 0.000000e+00 : f32
    %91 = vector.broadcast %cst_36 : f32 to vector<1x256xf32>
    %92 = arith.maximumf %90, %91 : vector<1x256xf32>
    %cst_37 = arith.constant -0.117855184 : f32
    %93 = vector.broadcast %cst_37 : f32 to vector<1x256xf32>
    %94 = arith.mulf %92, %93 : vector<1x256xf32>
    %95 = arith.addf %80, %94 : vector<1x256xf32>
    %cst_38 = arith.constant 0.0723929927 : f32
    %96 = vector.broadcast %cst_38 : f32 to vector<1x256xf32>
    %97 = arith.mulf %2, %96 : vector<1x256xf32>
    %cst_39 = arith.constant -0.236267716 : f32
    %98 = vector.broadcast %cst_39 : f32 to vector<1x256xf32>
    %99 = arith.mulf %3, %98 : vector<1x256xf32>
    %100 = arith.addf %97, %99 : vector<1x256xf32>
    %cst_40 = arith.constant -0.126801446 : f32
    %101 = vector.broadcast %cst_40 : f32 to vector<1x256xf32>
    %102 = arith.mulf %4, %101 : vector<1x256xf32>
    %103 = arith.addf %100, %102 : vector<1x256xf32>
    %cst_41 = arith.constant 0.000000e+00 : f32
    %104 = vector.broadcast %cst_41 : f32 to vector<1x256xf32>
    %105 = arith.addf %103, %104 : vector<1x256xf32>
    %cst_42 = arith.constant 0.000000e+00 : f32
    %106 = vector.broadcast %cst_42 : f32 to vector<1x256xf32>
    %107 = arith.maximumf %105, %106 : vector<1x256xf32>
    %cst_43 = arith.constant -0.114821963 : f32
    %108 = vector.broadcast %cst_43 : f32 to vector<1x256xf32>
    %109 = arith.mulf %107, %108 : vector<1x256xf32>
    %110 = arith.addf %95, %109 : vector<1x256xf32>
    %cst_44 = arith.constant -0.10255982 : f32
    %111 = vector.broadcast %cst_44 : f32 to vector<1x256xf32>
    %112 = arith.mulf %2, %111 : vector<1x256xf32>
    %cst_45 = arith.constant 0.155264929 : f32
    %113 = vector.broadcast %cst_45 : f32 to vector<1x256xf32>
    %114 = arith.mulf %3, %113 : vector<1x256xf32>
    %115 = arith.addf %112, %114 : vector<1x256xf32>
    %cst_46 = arith.constant -0.150076285 : f32
    %116 = vector.broadcast %cst_46 : f32 to vector<1x256xf32>
    %117 = arith.mulf %4, %116 : vector<1x256xf32>
    %118 = arith.addf %115, %117 : vector<1x256xf32>
    %cst_47 = arith.constant 0.000000e+00 : f32
    %119 = vector.broadcast %cst_47 : f32 to vector<1x256xf32>
    %120 = arith.addf %118, %119 : vector<1x256xf32>
    %cst_48 = arith.constant 0.000000e+00 : f32
    %121 = vector.broadcast %cst_48 : f32 to vector<1x256xf32>
    %122 = arith.maximumf %120, %121 : vector<1x256xf32>
    %cst_49 = arith.constant 0.0297165792 : f32
    %123 = vector.broadcast %cst_49 : f32 to vector<1x256xf32>
    %124 = arith.mulf %122, %123 : vector<1x256xf32>
    %125 = arith.addf %110, %124 : vector<1x256xf32>
    %cst_50 = arith.constant 0.166162804 : f32
    %126 = vector.broadcast %cst_50 : f32 to vector<1x256xf32>
    %127 = arith.mulf %2, %126 : vector<1x256xf32>
    %cst_51 = arith.constant 0.140542701 : f32
    %128 = vector.broadcast %cst_51 : f32 to vector<1x256xf32>
    %129 = arith.mulf %3, %128 : vector<1x256xf32>
    %130 = arith.addf %127, %129 : vector<1x256xf32>
    %cst_52 = arith.constant 0.00852167978 : f32
    %131 = vector.broadcast %cst_52 : f32 to vector<1x256xf32>
    %132 = arith.mulf %4, %131 : vector<1x256xf32>
    %133 = arith.addf %130, %132 : vector<1x256xf32>
    %cst_53 = arith.constant 0.000000e+00 : f32
    %134 = vector.broadcast %cst_53 : f32 to vector<1x256xf32>
    %135 = arith.addf %133, %134 : vector<1x256xf32>
    %cst_54 = arith.constant 0.000000e+00 : f32
    %136 = vector.broadcast %cst_54 : f32 to vector<1x256xf32>
    %137 = arith.maximumf %135, %136 : vector<1x256xf32>
    %cst_55 = arith.constant -0.131053597 : f32
    %138 = vector.broadcast %cst_55 : f32 to vector<1x256xf32>
    %139 = arith.mulf %137, %138 : vector<1x256xf32>
    %140 = arith.addf %125, %139 : vector<1x256xf32>
    %cst_56 = arith.constant -0.189102516 : f32
    %141 = vector.broadcast %cst_56 : f32 to vector<1x256xf32>
    %142 = arith.mulf %2, %141 : vector<1x256xf32>
    %cst_57 = arith.constant 0.0350379236 : f32
    %143 = vector.broadcast %cst_57 : f32 to vector<1x256xf32>
    %144 = arith.mulf %3, %143 : vector<1x256xf32>
    %145 = arith.addf %142, %144 : vector<1x256xf32>
    %cst_58 = arith.constant 0.180149928 : f32
    %146 = vector.broadcast %cst_58 : f32 to vector<1x256xf32>
    %147 = arith.mulf %4, %146 : vector<1x256xf32>
    %148 = arith.addf %145, %147 : vector<1x256xf32>
    %cst_59 = arith.constant 0.000000e+00 : f32
    %149 = vector.broadcast %cst_59 : f32 to vector<1x256xf32>
    %150 = arith.addf %148, %149 : vector<1x256xf32>
    %cst_60 = arith.constant 0.000000e+00 : f32
    %151 = vector.broadcast %cst_60 : f32 to vector<1x256xf32>
    %152 = arith.maximumf %150, %151 : vector<1x256xf32>
    %cst_61 = arith.constant 0.21302025 : f32
    %153 = vector.broadcast %cst_61 : f32 to vector<1x256xf32>
    %154 = arith.mulf %152, %153 : vector<1x256xf32>
    %155 = arith.addf %140, %154 : vector<1x256xf32>
    %cst_62 = arith.constant -0.12889339 : f32
    %156 = vector.broadcast %cst_62 : f32 to vector<1x256xf32>
    %157 = arith.mulf %2, %156 : vector<1x256xf32>
    %cst_63 = arith.constant 0.0062463074 : f32
    %158 = vector.broadcast %cst_63 : f32 to vector<1x256xf32>
    %159 = arith.mulf %3, %158 : vector<1x256xf32>
    %160 = arith.addf %157, %159 : vector<1x256xf32>
    %cst_64 = arith.constant 0.127769902 : f32
    %161 = vector.broadcast %cst_64 : f32 to vector<1x256xf32>
    %162 = arith.mulf %4, %161 : vector<1x256xf32>
    %163 = arith.addf %160, %162 : vector<1x256xf32>
    %cst_65 = arith.constant 0.000000e+00 : f32
    %164 = vector.broadcast %cst_65 : f32 to vector<1x256xf32>
    %165 = arith.addf %163, %164 : vector<1x256xf32>
    %cst_66 = arith.constant 0.000000e+00 : f32
    %166 = vector.broadcast %cst_66 : f32 to vector<1x256xf32>
    %167 = arith.maximumf %165, %166 : vector<1x256xf32>
    %cst_67 = arith.constant -0.0189572349 : f32
    %168 = vector.broadcast %cst_67 : f32 to vector<1x256xf32>
    %169 = arith.mulf %167, %168 : vector<1x256xf32>
    %170 = arith.addf %155, %169 : vector<1x256xf32>
    %cst_68 = arith.constant 0.0133606913 : f32
    %171 = vector.broadcast %cst_68 : f32 to vector<1x256xf32>
    %172 = arith.mulf %2, %171 : vector<1x256xf32>
    %cst_69 = arith.constant 0.114703886 : f32
    %173 = vector.broadcast %cst_69 : f32 to vector<1x256xf32>
    %174 = arith.mulf %3, %173 : vector<1x256xf32>
    %175 = arith.addf %172, %174 : vector<1x256xf32>
    %cst_70 = arith.constant 0.0492193848 : f32
    %176 = vector.broadcast %cst_70 : f32 to vector<1x256xf32>
    %177 = arith.mulf %4, %176 : vector<1x256xf32>
    %178 = arith.addf %175, %177 : vector<1x256xf32>
    %cst_71 = arith.constant 0.000000e+00 : f32
    %179 = vector.broadcast %cst_71 : f32 to vector<1x256xf32>
    %180 = arith.addf %178, %179 : vector<1x256xf32>
    %cst_72 = arith.constant 0.000000e+00 : f32
    %181 = vector.broadcast %cst_72 : f32 to vector<1x256xf32>
    %182 = arith.maximumf %180, %181 : vector<1x256xf32>
    %cst_73 = arith.constant 0.0964012145 : f32
    %183 = vector.broadcast %cst_73 : f32 to vector<1x256xf32>
    %184 = arith.mulf %182, %183 : vector<1x256xf32>
    %185 = arith.addf %170, %184 : vector<1x256xf32>
    %cst_74 = arith.constant -0.115303926 : f32
    %186 = vector.broadcast %cst_74 : f32 to vector<1x256xf32>
    %187 = arith.mulf %2, %186 : vector<1x256xf32>
    %cst_75 = arith.constant -0.0212455243 : f32
    %188 = vector.broadcast %cst_75 : f32 to vector<1x256xf32>
    %189 = arith.mulf %3, %188 : vector<1x256xf32>
    %190 = arith.addf %187, %189 : vector<1x256xf32>
    %cst_76 = arith.constant 0.0529482551 : f32
    %191 = vector.broadcast %cst_76 : f32 to vector<1x256xf32>
    %192 = arith.mulf %4, %191 : vector<1x256xf32>
    %193 = arith.addf %190, %192 : vector<1x256xf32>
    %cst_77 = arith.constant 0.000000e+00 : f32
    %194 = vector.broadcast %cst_77 : f32 to vector<1x256xf32>
    %195 = arith.addf %193, %194 : vector<1x256xf32>
    %cst_78 = arith.constant 0.000000e+00 : f32
    %196 = vector.broadcast %cst_78 : f32 to vector<1x256xf32>
    %197 = arith.maximumf %195, %196 : vector<1x256xf32>
    %cst_79 = arith.constant -0.130110011 : f32
    %198 = vector.broadcast %cst_79 : f32 to vector<1x256xf32>
    %199 = arith.mulf %197, %198 : vector<1x256xf32>
    %200 = arith.addf %185, %199 : vector<1x256xf32>
    %cst_80 = arith.constant 0.0239296295 : f32
    %201 = vector.broadcast %cst_80 : f32 to vector<1x256xf32>
    %202 = arith.mulf %2, %201 : vector<1x256xf32>
    %cst_81 = arith.constant -0.0339674912 : f32
    %203 = vector.broadcast %cst_81 : f32 to vector<1x256xf32>
    %204 = arith.mulf %3, %203 : vector<1x256xf32>
    %205 = arith.addf %202, %204 : vector<1x256xf32>
    %cst_82 = arith.constant 0.0690943077 : f32
    %206 = vector.broadcast %cst_82 : f32 to vector<1x256xf32>
    %207 = arith.mulf %4, %206 : vector<1x256xf32>
    %208 = arith.addf %205, %207 : vector<1x256xf32>
    %cst_83 = arith.constant 0.000000e+00 : f32
    %209 = vector.broadcast %cst_83 : f32 to vector<1x256xf32>
    %210 = arith.addf %208, %209 : vector<1x256xf32>
    %cst_84 = arith.constant 0.000000e+00 : f32
    %211 = vector.broadcast %cst_84 : f32 to vector<1x256xf32>
    %212 = arith.maximumf %210, %211 : vector<1x256xf32>
    %cst_85 = arith.constant -0.0748693869 : f32
    %213 = vector.broadcast %cst_85 : f32 to vector<1x256xf32>
    %214 = arith.mulf %212, %213 : vector<1x256xf32>
    %215 = arith.addf %200, %214 : vector<1x256xf32>
    %cst_86 = arith.constant 0.174480736 : f32
    %216 = vector.broadcast %cst_86 : f32 to vector<1x256xf32>
    %217 = arith.mulf %2, %216 : vector<1x256xf32>
    %cst_87 = arith.constant 0.0688853487 : f32
    %218 = vector.broadcast %cst_87 : f32 to vector<1x256xf32>
    %219 = arith.mulf %3, %218 : vector<1x256xf32>
    %220 = arith.addf %217, %219 : vector<1x256xf32>
    %cst_88 = arith.constant 8.480790e-02 : f32
    %221 = vector.broadcast %cst_88 : f32 to vector<1x256xf32>
    %222 = arith.mulf %4, %221 : vector<1x256xf32>
    %223 = arith.addf %220, %222 : vector<1x256xf32>
    %cst_89 = arith.constant 0.000000e+00 : f32
    %224 = vector.broadcast %cst_89 : f32 to vector<1x256xf32>
    %225 = arith.addf %223, %224 : vector<1x256xf32>
    %cst_90 = arith.constant 0.000000e+00 : f32
    %226 = vector.broadcast %cst_90 : f32 to vector<1x256xf32>
    %227 = arith.maximumf %225, %226 : vector<1x256xf32>
    %cst_91 = arith.constant -0.0372998379 : f32
    %228 = vector.broadcast %cst_91 : f32 to vector<1x256xf32>
    %229 = arith.mulf %227, %228 : vector<1x256xf32>
    %230 = arith.addf %215, %229 : vector<1x256xf32>
    %cst_92 = arith.constant 0.0505018905 : f32
    %231 = vector.broadcast %cst_92 : f32 to vector<1x256xf32>
    %232 = arith.mulf %2, %231 : vector<1x256xf32>
    %cst_93 = arith.constant -0.0339238755 : f32
    %233 = vector.broadcast %cst_93 : f32 to vector<1x256xf32>
    %234 = arith.mulf %3, %233 : vector<1x256xf32>
    %235 = arith.addf %232, %234 : vector<1x256xf32>
    %cst_94 = arith.constant -1.282900e-02 : f32
    %236 = vector.broadcast %cst_94 : f32 to vector<1x256xf32>
    %237 = arith.mulf %4, %236 : vector<1x256xf32>
    %238 = arith.addf %235, %237 : vector<1x256xf32>
    %cst_95 = arith.constant 0.000000e+00 : f32
    %239 = vector.broadcast %cst_95 : f32 to vector<1x256xf32>
    %240 = arith.addf %238, %239 : vector<1x256xf32>
    %cst_96 = arith.constant 0.000000e+00 : f32
    %241 = vector.broadcast %cst_96 : f32 to vector<1x256xf32>
    %242 = arith.maximumf %240, %241 : vector<1x256xf32>
    %cst_97 = arith.constant 0.0442790687 : f32
    %243 = vector.broadcast %cst_97 : f32 to vector<1x256xf32>
    %244 = arith.mulf %242, %243 : vector<1x256xf32>
    %245 = arith.addf %230, %244 : vector<1x256xf32>
    %cst_98 = arith.constant 0.0595053025 : f32
    %246 = vector.broadcast %cst_98 : f32 to vector<1x256xf32>
    %247 = arith.mulf %2, %246 : vector<1x256xf32>
    %cst_99 = arith.constant 0.0492005311 : f32
    %248 = vector.broadcast %cst_99 : f32 to vector<1x256xf32>
    %249 = arith.mulf %3, %248 : vector<1x256xf32>
    %250 = arith.addf %247, %249 : vector<1x256xf32>
    %cst_100 = arith.constant -0.0668752939 : f32
    %251 = vector.broadcast %cst_100 : f32 to vector<1x256xf32>
    %252 = arith.mulf %4, %251 : vector<1x256xf32>
    %253 = arith.addf %250, %252 : vector<1x256xf32>
    %cst_101 = arith.constant 0.000000e+00 : f32
    %254 = vector.broadcast %cst_101 : f32 to vector<1x256xf32>
    %255 = arith.addf %253, %254 : vector<1x256xf32>
    %cst_102 = arith.constant 0.000000e+00 : f32
    %256 = vector.broadcast %cst_102 : f32 to vector<1x256xf32>
    %257 = arith.maximumf %255, %256 : vector<1x256xf32>
    %cst_103 = arith.constant -0.119029954 : f32
    %258 = vector.broadcast %cst_103 : f32 to vector<1x256xf32>
    %259 = arith.mulf %257, %258 : vector<1x256xf32>
    %260 = arith.addf %245, %259 : vector<1x256xf32>
    %cst_104 = arith.constant -0.0472838096 : f32
    %261 = vector.broadcast %cst_104 : f32 to vector<1x256xf32>
    %262 = arith.mulf %2, %261 : vector<1x256xf32>
    %cst_105 = arith.constant 0.0211594831 : f32
    %263 = vector.broadcast %cst_105 : f32 to vector<1x256xf32>
    %264 = arith.mulf %3, %263 : vector<1x256xf32>
    %265 = arith.addf %262, %264 : vector<1x256xf32>
    %cst_106 = arith.constant 0.148985967 : f32
    %266 = vector.broadcast %cst_106 : f32 to vector<1x256xf32>
    %267 = arith.mulf %4, %266 : vector<1x256xf32>
    %268 = arith.addf %265, %267 : vector<1x256xf32>
    %cst_107 = arith.constant 0.000000e+00 : f32
    %269 = vector.broadcast %cst_107 : f32 to vector<1x256xf32>
    %270 = arith.addf %268, %269 : vector<1x256xf32>
    %cst_108 = arith.constant 0.000000e+00 : f32
    %271 = vector.broadcast %cst_108 : f32 to vector<1x256xf32>
    %272 = arith.maximumf %270, %271 : vector<1x256xf32>
    %cst_109 = arith.constant -0.00692556379 : f32
    %273 = vector.broadcast %cst_109 : f32 to vector<1x256xf32>
    %274 = arith.mulf %272, %273 : vector<1x256xf32>
    %275 = arith.addf %260, %274 : vector<1x256xf32>
    %cst_110 = arith.constant 0.0915637537 : f32
    %276 = vector.broadcast %cst_110 : f32 to vector<1x256xf32>
    %277 = arith.mulf %2, %276 : vector<1x256xf32>
    %cst_111 = arith.constant -0.18126069 : f32
    %278 = vector.broadcast %cst_111 : f32 to vector<1x256xf32>
    %279 = arith.mulf %3, %278 : vector<1x256xf32>
    %280 = arith.addf %277, %279 : vector<1x256xf32>
    %cst_112 = arith.constant -0.0164497476 : f32
    %281 = vector.broadcast %cst_112 : f32 to vector<1x256xf32>
    %282 = arith.mulf %4, %281 : vector<1x256xf32>
    %283 = arith.addf %280, %282 : vector<1x256xf32>
    %cst_113 = arith.constant 0.000000e+00 : f32
    %284 = vector.broadcast %cst_113 : f32 to vector<1x256xf32>
    %285 = arith.addf %283, %284 : vector<1x256xf32>
    %cst_114 = arith.constant 0.000000e+00 : f32
    %286 = vector.broadcast %cst_114 : f32 to vector<1x256xf32>
    %287 = arith.maximumf %285, %286 : vector<1x256xf32>
    %cst_115 = arith.constant -0.0956058874 : f32
    %288 = vector.broadcast %cst_115 : f32 to vector<1x256xf32>
    %289 = arith.mulf %287, %288 : vector<1x256xf32>
    %290 = arith.addf %275, %289 : vector<1x256xf32>
    %cst_116 = arith.constant 0.0361203402 : f32
    %291 = vector.broadcast %cst_116 : f32 to vector<1x256xf32>
    %292 = arith.mulf %2, %291 : vector<1x256xf32>
    %cst_117 = arith.constant 0.188417062 : f32
    %293 = vector.broadcast %cst_117 : f32 to vector<1x256xf32>
    %294 = arith.mulf %3, %293 : vector<1x256xf32>
    %295 = arith.addf %292, %294 : vector<1x256xf32>
    %cst_118 = arith.constant -0.178629965 : f32
    %296 = vector.broadcast %cst_118 : f32 to vector<1x256xf32>
    %297 = arith.mulf %4, %296 : vector<1x256xf32>
    %298 = arith.addf %295, %297 : vector<1x256xf32>
    %cst_119 = arith.constant 0.000000e+00 : f32
    %299 = vector.broadcast %cst_119 : f32 to vector<1x256xf32>
    %300 = arith.addf %298, %299 : vector<1x256xf32>
    %cst_120 = arith.constant 0.000000e+00 : f32
    %301 = vector.broadcast %cst_120 : f32 to vector<1x256xf32>
    %302 = arith.maximumf %300, %301 : vector<1x256xf32>
    %cst_121 = arith.constant -0.19587639 : f32
    %303 = vector.broadcast %cst_121 : f32 to vector<1x256xf32>
    %304 = arith.mulf %302, %303 : vector<1x256xf32>
    %305 = arith.addf %290, %304 : vector<1x256xf32>
    %cst_122 = arith.constant -0.0634164363 : f32
    %306 = vector.broadcast %cst_122 : f32 to vector<1x256xf32>
    %307 = arith.mulf %2, %306 : vector<1x256xf32>
    %cst_123 = arith.constant 0.0845177248 : f32
    %308 = vector.broadcast %cst_123 : f32 to vector<1x256xf32>
    %309 = arith.mulf %3, %308 : vector<1x256xf32>
    %310 = arith.addf %307, %309 : vector<1x256xf32>
    %cst_124 = arith.constant -0.06098333 : f32
    %311 = vector.broadcast %cst_124 : f32 to vector<1x256xf32>
    %312 = arith.mulf %4, %311 : vector<1x256xf32>
    %313 = arith.addf %310, %312 : vector<1x256xf32>
    %cst_125 = arith.constant 0.000000e+00 : f32
    %314 = vector.broadcast %cst_125 : f32 to vector<1x256xf32>
    %315 = arith.addf %313, %314 : vector<1x256xf32>
    %cst_126 = arith.constant 0.000000e+00 : f32
    %316 = vector.broadcast %cst_126 : f32 to vector<1x256xf32>
    %317 = arith.maximumf %315, %316 : vector<1x256xf32>
    %cst_127 = arith.constant -0.110599421 : f32
    %318 = vector.broadcast %cst_127 : f32 to vector<1x256xf32>
    %319 = arith.mulf %317, %318 : vector<1x256xf32>
    %320 = arith.addf %305, %319 : vector<1x256xf32>
    %cst_128 = arith.constant -0.0870491042 : f32
    %321 = vector.broadcast %cst_128 : f32 to vector<1x256xf32>
    %322 = arith.mulf %2, %321 : vector<1x256xf32>
    %cst_129 = arith.constant 0.168778226 : f32
    %323 = vector.broadcast %cst_129 : f32 to vector<1x256xf32>
    %324 = arith.mulf %3, %323 : vector<1x256xf32>
    %325 = arith.addf %322, %324 : vector<1x256xf32>
    %cst_130 = arith.constant 0.188907191 : f32
    %326 = vector.broadcast %cst_130 : f32 to vector<1x256xf32>
    %327 = arith.mulf %4, %326 : vector<1x256xf32>
    %328 = arith.addf %325, %327 : vector<1x256xf32>
    %cst_131 = arith.constant 0.000000e+00 : f32
    %329 = vector.broadcast %cst_131 : f32 to vector<1x256xf32>
    %330 = arith.addf %328, %329 : vector<1x256xf32>
    %cst_132 = arith.constant 0.000000e+00 : f32
    %331 = vector.broadcast %cst_132 : f32 to vector<1x256xf32>
    %332 = arith.maximumf %330, %331 : vector<1x256xf32>
    %cst_133 = arith.constant -0.0322005227 : f32
    %333 = vector.broadcast %cst_133 : f32 to vector<1x256xf32>
    %334 = arith.mulf %332, %333 : vector<1x256xf32>
    %335 = arith.addf %320, %334 : vector<1x256xf32>
    %cst_134 = arith.constant 7.583880e-02 : f32
    %336 = vector.broadcast %cst_134 : f32 to vector<1x256xf32>
    %337 = arith.mulf %2, %336 : vector<1x256xf32>
    %cst_135 = arith.constant 0.164618954 : f32
    %338 = vector.broadcast %cst_135 : f32 to vector<1x256xf32>
    %339 = arith.mulf %3, %338 : vector<1x256xf32>
    %340 = arith.addf %337, %339 : vector<1x256xf32>
    %cst_136 = arith.constant -0.0372855552 : f32
    %341 = vector.broadcast %cst_136 : f32 to vector<1x256xf32>
    %342 = arith.mulf %4, %341 : vector<1x256xf32>
    %343 = arith.addf %340, %342 : vector<1x256xf32>
    %cst_137 = arith.constant 0.000000e+00 : f32
    %344 = vector.broadcast %cst_137 : f32 to vector<1x256xf32>
    %345 = arith.addf %343, %344 : vector<1x256xf32>
    %cst_138 = arith.constant 0.000000e+00 : f32
    %346 = vector.broadcast %cst_138 : f32 to vector<1x256xf32>
    %347 = arith.maximumf %345, %346 : vector<1x256xf32>
    %cst_139 = arith.constant 0.133032992 : f32
    %348 = vector.broadcast %cst_139 : f32 to vector<1x256xf32>
    %349 = arith.mulf %347, %348 : vector<1x256xf32>
    %350 = arith.addf %335, %349 : vector<1x256xf32>
    %cst_140 = arith.constant 0.106285349 : f32
    %351 = vector.broadcast %cst_140 : f32 to vector<1x256xf32>
    %352 = arith.mulf %2, %351 : vector<1x256xf32>
    %cst_141 = arith.constant -0.0771603361 : f32
    %353 = vector.broadcast %cst_141 : f32 to vector<1x256xf32>
    %354 = arith.mulf %3, %353 : vector<1x256xf32>
    %355 = arith.addf %352, %354 : vector<1x256xf32>
    %cst_142 = arith.constant 0.268850416 : f32
    %356 = vector.broadcast %cst_142 : f32 to vector<1x256xf32>
    %357 = arith.mulf %4, %356 : vector<1x256xf32>
    %358 = arith.addf %355, %357 : vector<1x256xf32>
    %cst_143 = arith.constant 0.000000e+00 : f32
    %359 = vector.broadcast %cst_143 : f32 to vector<1x256xf32>
    %360 = arith.addf %358, %359 : vector<1x256xf32>
    %cst_144 = arith.constant 0.000000e+00 : f32
    %361 = vector.broadcast %cst_144 : f32 to vector<1x256xf32>
    %362 = arith.maximumf %360, %361 : vector<1x256xf32>
    %cst_145 = arith.constant 0.081223689 : f32
    %363 = vector.broadcast %cst_145 : f32 to vector<1x256xf32>
    %364 = arith.mulf %362, %363 : vector<1x256xf32>
    %365 = arith.addf %350, %364 : vector<1x256xf32>
    %cst_146 = arith.constant 0.0908356532 : f32
    %366 = vector.broadcast %cst_146 : f32 to vector<1x256xf32>
    %367 = arith.mulf %2, %366 : vector<1x256xf32>
    %cst_147 = arith.constant 0.120864585 : f32
    %368 = vector.broadcast %cst_147 : f32 to vector<1x256xf32>
    %369 = arith.mulf %3, %368 : vector<1x256xf32>
    %370 = arith.addf %367, %369 : vector<1x256xf32>
    %cst_148 = arith.constant -0.052426111 : f32
    %371 = vector.broadcast %cst_148 : f32 to vector<1x256xf32>
    %372 = arith.mulf %4, %371 : vector<1x256xf32>
    %373 = arith.addf %370, %372 : vector<1x256xf32>
    %cst_149 = arith.constant 0.000000e+00 : f32
    %374 = vector.broadcast %cst_149 : f32 to vector<1x256xf32>
    %375 = arith.addf %373, %374 : vector<1x256xf32>
    %cst_150 = arith.constant 0.000000e+00 : f32
    %376 = vector.broadcast %cst_150 : f32 to vector<1x256xf32>
    %377 = arith.maximumf %375, %376 : vector<1x256xf32>
    %cst_151 = arith.constant -0.115882389 : f32
    %378 = vector.broadcast %cst_151 : f32 to vector<1x256xf32>
    %379 = arith.mulf %377, %378 : vector<1x256xf32>
    %380 = arith.addf %365, %379 : vector<1x256xf32>
    %cst_152 = arith.constant -0.0492320172 : f32
    %381 = vector.broadcast %cst_152 : f32 to vector<1x256xf32>
    %382 = arith.mulf %2, %381 : vector<1x256xf32>
    %cst_153 = arith.constant -0.0971193984 : f32
    %383 = vector.broadcast %cst_153 : f32 to vector<1x256xf32>
    %384 = arith.mulf %3, %383 : vector<1x256xf32>
    %385 = arith.addf %382, %384 : vector<1x256xf32>
    %cst_154 = arith.constant 0.137277171 : f32
    %386 = vector.broadcast %cst_154 : f32 to vector<1x256xf32>
    %387 = arith.mulf %4, %386 : vector<1x256xf32>
    %388 = arith.addf %385, %387 : vector<1x256xf32>
    %cst_155 = arith.constant 0.000000e+00 : f32
    %389 = vector.broadcast %cst_155 : f32 to vector<1x256xf32>
    %390 = arith.addf %388, %389 : vector<1x256xf32>
    %cst_156 = arith.constant 0.000000e+00 : f32
    %391 = vector.broadcast %cst_156 : f32 to vector<1x256xf32>
    %392 = arith.maximumf %390, %391 : vector<1x256xf32>
    %cst_157 = arith.constant -0.0543241315 : f32
    %393 = vector.broadcast %cst_157 : f32 to vector<1x256xf32>
    %394 = arith.mulf %392, %393 : vector<1x256xf32>
    %395 = arith.addf %380, %394 : vector<1x256xf32>
    %cst_158 = arith.constant 0.0888492092 : f32
    %396 = vector.broadcast %cst_158 : f32 to vector<1x256xf32>
    %397 = arith.mulf %2, %396 : vector<1x256xf32>
    %cst_159 = arith.constant 0.107095659 : f32
    %398 = vector.broadcast %cst_159 : f32 to vector<1x256xf32>
    %399 = arith.mulf %3, %398 : vector<1x256xf32>
    %400 = arith.addf %397, %399 : vector<1x256xf32>
    %cst_160 = arith.constant -0.0818178877 : f32
    %401 = vector.broadcast %cst_160 : f32 to vector<1x256xf32>
    %402 = arith.mulf %4, %401 : vector<1x256xf32>
    %403 = arith.addf %400, %402 : vector<1x256xf32>
    %cst_161 = arith.constant 0.000000e+00 : f32
    %404 = vector.broadcast %cst_161 : f32 to vector<1x256xf32>
    %405 = arith.addf %403, %404 : vector<1x256xf32>
    %cst_162 = arith.constant 0.000000e+00 : f32
    %406 = vector.broadcast %cst_162 : f32 to vector<1x256xf32>
    %407 = arith.maximumf %405, %406 : vector<1x256xf32>
    %cst_163 = arith.constant 0.0807830393 : f32
    %408 = vector.broadcast %cst_163 : f32 to vector<1x256xf32>
    %409 = arith.mulf %407, %408 : vector<1x256xf32>
    %410 = arith.addf %395, %409 : vector<1x256xf32>
    %cst_164 = arith.constant 0.164539084 : f32
    %411 = vector.broadcast %cst_164 : f32 to vector<1x256xf32>
    %412 = arith.mulf %2, %411 : vector<1x256xf32>
    %cst_165 = arith.constant -0.0177192818 : f32
    %413 = vector.broadcast %cst_165 : f32 to vector<1x256xf32>
    %414 = arith.mulf %3, %413 : vector<1x256xf32>
    %415 = arith.addf %412, %414 : vector<1x256xf32>
    %cst_166 = arith.constant 0.117533147 : f32
    %416 = vector.broadcast %cst_166 : f32 to vector<1x256xf32>
    %417 = arith.mulf %4, %416 : vector<1x256xf32>
    %418 = arith.addf %415, %417 : vector<1x256xf32>
    %cst_167 = arith.constant 0.000000e+00 : f32
    %419 = vector.broadcast %cst_167 : f32 to vector<1x256xf32>
    %420 = arith.addf %418, %419 : vector<1x256xf32>
    %cst_168 = arith.constant 0.000000e+00 : f32
    %421 = vector.broadcast %cst_168 : f32 to vector<1x256xf32>
    %422 = arith.maximumf %420, %421 : vector<1x256xf32>
    %cst_169 = arith.constant 0.165460438 : f32
    %423 = vector.broadcast %cst_169 : f32 to vector<1x256xf32>
    %424 = arith.mulf %422, %423 : vector<1x256xf32>
    %425 = arith.addf %410, %424 : vector<1x256xf32>
    %cst_170 = arith.constant -0.251586586 : f32
    %426 = vector.broadcast %cst_170 : f32 to vector<1x256xf32>
    %427 = arith.mulf %2, %426 : vector<1x256xf32>
    %cst_171 = arith.constant 0.0863727778 : f32
    %428 = vector.broadcast %cst_171 : f32 to vector<1x256xf32>
    %429 = arith.mulf %3, %428 : vector<1x256xf32>
    %430 = arith.addf %427, %429 : vector<1x256xf32>
    %cst_172 = arith.constant 0.0332387052 : f32
    %431 = vector.broadcast %cst_172 : f32 to vector<1x256xf32>
    %432 = arith.mulf %4, %431 : vector<1x256xf32>
    %433 = arith.addf %430, %432 : vector<1x256xf32>
    %cst_173 = arith.constant 0.000000e+00 : f32
    %434 = vector.broadcast %cst_173 : f32 to vector<1x256xf32>
    %435 = arith.addf %433, %434 : vector<1x256xf32>
    %cst_174 = arith.constant 0.000000e+00 : f32
    %436 = vector.broadcast %cst_174 : f32 to vector<1x256xf32>
    %437 = arith.maximumf %435, %436 : vector<1x256xf32>
    %cst_175 = arith.constant -0.0409309864 : f32
    %438 = vector.broadcast %cst_175 : f32 to vector<1x256xf32>
    %439 = arith.mulf %437, %438 : vector<1x256xf32>
    %440 = arith.addf %425, %439 : vector<1x256xf32>
    %cst_176 = arith.constant 0.0441780686 : f32
    %441 = vector.broadcast %cst_176 : f32 to vector<1x256xf32>
    %442 = arith.mulf %2, %441 : vector<1x256xf32>
    %cst_177 = arith.constant 0.0405201577 : f32
    %443 = vector.broadcast %cst_177 : f32 to vector<1x256xf32>
    %444 = arith.mulf %3, %443 : vector<1x256xf32>
    %445 = arith.addf %442, %444 : vector<1x256xf32>
    %cst_178 = arith.constant 0.0144224754 : f32
    %446 = vector.broadcast %cst_178 : f32 to vector<1x256xf32>
    %447 = arith.mulf %4, %446 : vector<1x256xf32>
    %448 = arith.addf %445, %447 : vector<1x256xf32>
    %cst_179 = arith.constant 0.000000e+00 : f32
    %449 = vector.broadcast %cst_179 : f32 to vector<1x256xf32>
    %450 = arith.addf %448, %449 : vector<1x256xf32>
    %cst_180 = arith.constant 0.000000e+00 : f32
    %451 = vector.broadcast %cst_180 : f32 to vector<1x256xf32>
    %452 = arith.maximumf %450, %451 : vector<1x256xf32>
    %cst_181 = arith.constant 0.00538884476 : f32
    %453 = vector.broadcast %cst_181 : f32 to vector<1x256xf32>
    %454 = arith.mulf %452, %453 : vector<1x256xf32>
    %455 = arith.addf %440, %454 : vector<1x256xf32>
    %cst_182 = arith.constant 0.181731269 : f32
    %456 = vector.broadcast %cst_182 : f32 to vector<1x256xf32>
    %457 = arith.mulf %2, %456 : vector<1x256xf32>
    %cst_183 = arith.constant -0.0620884113 : f32
    %458 = vector.broadcast %cst_183 : f32 to vector<1x256xf32>
    %459 = arith.mulf %3, %458 : vector<1x256xf32>
    %460 = arith.addf %457, %459 : vector<1x256xf32>
    %cst_184 = arith.constant 0.185381278 : f32
    %461 = vector.broadcast %cst_184 : f32 to vector<1x256xf32>
    %462 = arith.mulf %4, %461 : vector<1x256xf32>
    %463 = arith.addf %460, %462 : vector<1x256xf32>
    %cst_185 = arith.constant 0.000000e+00 : f32
    %464 = vector.broadcast %cst_185 : f32 to vector<1x256xf32>
    %465 = arith.addf %463, %464 : vector<1x256xf32>
    %cst_186 = arith.constant 0.000000e+00 : f32
    %466 = vector.broadcast %cst_186 : f32 to vector<1x256xf32>
    %467 = arith.maximumf %465, %466 : vector<1x256xf32>
    %cst_187 = arith.constant -0.0648388192 : f32
    %468 = vector.broadcast %cst_187 : f32 to vector<1x256xf32>
    %469 = arith.mulf %467, %468 : vector<1x256xf32>
    %470 = arith.addf %455, %469 : vector<1x256xf32>
    %cst_188 = arith.constant -0.117313884 : f32
    %471 = vector.broadcast %cst_188 : f32 to vector<1x256xf32>
    %472 = arith.mulf %2, %471 : vector<1x256xf32>
    %cst_189 = arith.constant 0.0230393931 : f32
    %473 = vector.broadcast %cst_189 : f32 to vector<1x256xf32>
    %474 = arith.mulf %3, %473 : vector<1x256xf32>
    %475 = arith.addf %472, %474 : vector<1x256xf32>
    %cst_190 = arith.constant -0.0400607325 : f32
    %476 = vector.broadcast %cst_190 : f32 to vector<1x256xf32>
    %477 = arith.mulf %4, %476 : vector<1x256xf32>
    %478 = arith.addf %475, %477 : vector<1x256xf32>
    %cst_191 = arith.constant 0.000000e+00 : f32
    %479 = vector.broadcast %cst_191 : f32 to vector<1x256xf32>
    %480 = arith.addf %478, %479 : vector<1x256xf32>
    %cst_192 = arith.constant 0.000000e+00 : f32
    %481 = vector.broadcast %cst_192 : f32 to vector<1x256xf32>
    %482 = arith.maximumf %480, %481 : vector<1x256xf32>
    %cst_193 = arith.constant -0.176759571 : f32
    %483 = vector.broadcast %cst_193 : f32 to vector<1x256xf32>
    %484 = arith.mulf %482, %483 : vector<1x256xf32>
    %485 = arith.addf %470, %484 : vector<1x256xf32>
    %486 = arith.negf %485 : vector<1x256xf32>
    %487 = math.exp %486 : vector<1x256xf32>
    %cst_194 = arith.constant 1.000000e+00 : f32
    %488 = vector.broadcast %cst_194 : f32 to vector<1x256xf32>
    %489 = arith.addf %488, %487 : vector<1x256xf32>
    %490 = arith.divf %488, %489 : vector<1x256xf32>
    %c0_195 = arith.constant 0 : index
    %c0_196 = arith.constant 0 : index
    %c0_197 = arith.constant 0 : index
    %491 = vector.load %arg3[%c0_195, %c0_196, %c0_197] : memref<1x1x256xf32, #tpu.memory_space<vmem>>, vector<1x1x256xf32>
    %492 = vector.shape_cast %491 : vector<1x1x256xf32> to vector<1x256xf32>
    %493 = vector.shape_cast %490 : vector<1x256xf32> to vector<1x1x256xf32>
    tpu.vector_store %arg3[%c0_195, %c0_196, %c0_197], %493 {strides = array<i32>} : memref<1x1x256xf32, #tpu.memory_space<vmem>>, vector<1x1x256xf32>,
    return
  }
  func.func @transform_0(%arg0: i32, %arg1: i32) -> (i32, i32, i32) {
    %c0_i32 = arith.constant 0 : i32
    %c0_i32_0 = arith.constant 0 : i32
    return %arg0, %c0_i32, %arg1 : i32, i32, i32
  }
  func.func @transform_1(%arg0: i32, %arg1: i32) -> (i32, i32, i32) {
    %c0_i32 = arith.constant 0 : i32
    %c0_i32_0 = arith.constant 0 : i32
    return %arg0, %c0_i32, %arg1 : i32, i32, i32
  }
}

</mosaic_0001>

<llo_original>
// kernel: tpu_custom_call.1
$region0: #{tpu_custom_call.1}
  #allocation0 [shape = 'u32[]', space=smem, size = 0x4, offset = 0x4, fixed_abs, tag = 'smem constant byte address 0x4 - core index']
  #allocation1 [shape = 'u32[72,128]{1,0:T(1,128)}', space=vmem, size = 0x9000, scoped, tag = 'internal scratch']
  %s0 = inlined_call_operand.vmem [shape: f32[2,3,256], index: 0, kind: input, shape index: {}]
  %s1 = inlined_call_operand.hbm [shape: f32[2,1,256], index: 1, kind: output, shape index: {}]
  %s2 = sld [smem:[#allocation0]]
  $region37: #{tpu_custom_call.1} parent=0
    _
  %s4 = ssub.s32 1, %s2
  %s5 = scalar_select 0, %s4, %s2
  $region1: #{tpu_custom_call.1} parent=0
    #allocation2 [shape = 'u8[2048]{0}', space=vmem, size = 0x800, scoped, tag = 'output window, operand 0']
    #allocation3 [shape = 's32[2]{0}', space=sflag, size = 0x8, scoped, tag = 'scoped memory for tpu_custom_call.1']
    %6 = vsyncpa [#allocation3], 0
    %s7 = scalar_lea.sflag [#allocation3], 1
    %8 = vsyncpa %s7, 0
    loop: start=0, step=1, limit=4
    $region2: #{tpu_custom_call.1} parent=1 // loop_pre_header
      _
    $region3: #{tpu_custom_call.1} parent=1 // loop_header
      %s10 = sphi 0, %s14
      %p11 = scmp.ge.s32.totalorder %s10, 4
      %s17 = sphi 0, %s29
      %s18 = sphi 0, %s25
      %s19 = sphi 0, %s17
      %s20 = sphi 0, %s18
      %s21 = sphi 0, %s19
      %s22 = sphi 0, %s20
      %s34 = sphi 0, %s36
      %s37 = sphi 0, %s34
      %s38 = sphi 0, %s37
      %s54 = sphi 0, %s38
      %s62 = sphi 0, %s64
      %s65 = sphi 0, %s62
      %s66 = sphi 0, %s65
      %s82 = sphi 0, %s66
    $region4: #{tpu_custom_call.1} parent=1 // loop_header_branch
      %13 = sbr.rel (%p11) target = $region8
    $region5: #{tpu_custom_call.1} parent=1 // loop_body
      %s15 = ssub.s32 %s10, 1
      %s16 = ssub.s32 %s10, 2
      %s23 = sadd.s32 1, %s18
      %p24 = scmp.ge.s32.totalorder %s23, 1
      %s25 = scalar_select %p24, 0, %s23
      %s26 = sadd.s32 1, %s17
      %s27 = scalar_select %p24, %s26, %s17
      %p28 = scmp.ge.s32.totalorder %s27, 2
      %s29 = scalar_select %p28, 0, %s27
      %s30 = ssub.s32 %s17, %s29
      %s31 = ssub.s32 %s18, %s25
      %s32 = sor.u32 %s30, %s31
      %p33 = scmp.eq.s32.totalorder %s32, 0
      %s35 = sadd.s32 %s34, 1
      %s36 = scalar_select %p33, %s34, %s35
      %p39 = pneg %p33
      %p40 = scmp.eq.s32.totalorder %s10, 1
      %p41 = por %p39, %p40
      %p42 = scmp.ne.s32.totalorder %s34, %s37
      %p43 = scmp.eq.s32.totalorder %s10, 0
      %p44 = por %p42, %p43
      %p45 = scmp.ne.s32.totalorder %s34, %s37
      %p46 = scmp.eq.s32.totalorder %s15, 1
      %p47 = por %p45, %p46
      %p48 = scmp.ne.s32.totalorder %s37, %s38
      %p49 = scmp.eq.s32.totalorder %s15, 0
      %p50 = por %p48, %p49
      %p51 = scmp.ne.s32.totalorder %s37, %s38
      %p52 = scmp.eq.s32.totalorder %s16, 1
      %p53 = por %p51, %p52
      %p55 = scmp.ne.s32.totalorder %s38, %s54
      %p56 = scmp.eq.s32.totalorder %s16, 0
      %p57 = por %p55, %p56
      %s58 = ssub.s32 %s17, %s29
      %s59 = ssub.s32 %s18, %s25
      %s60 = sor.u32 %s58, %s59
      %p61 = scmp.eq.s32.totalorder %s60, 0
      %s63 = sadd.s32 %s62, 1
      %s64 = scalar_select %p61, %s62, %s63
      %p67 = pneg %p61
      %p68 = scmp.eq.s32.totalorder %s10, 1
      %p69 = por %p67, %p68
      %p70 = scmp.ne.s32.totalorder %s62, %s65
      %p71 = scmp.eq.s32.totalorder %s10, 0
      %p72 = por %p70, %p71
      %p73 = scmp.ne.s32.totalorder %s62, %s65
      %p74 = scmp.eq.s32.totalorder %s15, 1
      %p75 = por %p73, %p74
      %p76 = scmp.ne.s32.totalorder %s65, %s66
      %p77 = scmp.eq.s32.totalorder %s15, 0
      %p78 = por %p76, %p77
      %p79 = scmp.ne.s32.totalorder %s65, %s66
      %p80 = scmp.eq.s32.totalorder %s16, 1
      %p81 = por %p79, %p80
      %p83 = scmp.ne.s32.totalorder %s66, %s82
      %p84 = scmp.eq.s32.totalorder %s16, 0
      %p85 = por %p83, %p84
      %p86 = scmp.le.s32.totalorder 1, %s10
      %p87 = scmp.lt.s32.totalorder %s10, 3
      %p88 = pnand %p86, %p87
      %p89 = pneg %p88
      // Predicated region
      $region9: #{tpu_custom_call.1} parent=5 // pred_check
        _
      $region10: #{tpu_custom_call.1} parent=5 // pred_check_branch
        %91 = sbr.rel (%p88) target = $region12
      $region11: #{tpu_custom_call.1} parent=5 // pred_region
        %s92 = ssub.s32 %s10, 1
      $region12: #{tpu_custom_call.1} parent=5 // pred_fallthru
        _
      %p93 = scmp.lt.s32.totalorder %s10, 2
      // Predicated region
      $region13: #{tpu_custom_call.1} parent=5 // pred_check
        %p94 = pneg %p93
      $region14: #{tpu_custom_call.1} parent=5 // pred_check_branch
        %96 = sbr.rel (%p94) target = $region16
      $region15: #{tpu_custom_call.1} parent=5 // pred_region
        // Predicated region
        $region17: #{tpu_custom_call.1} parent=15 // pred_check
          %p97 = pneg %p44
        $region18: #{tpu_custom_call.1} parent=15 // pred_check_branch
          %99 = sbr.rel (%p97) target = $region20
        $region19: #{tpu_custom_call.1} parent=15 // pred_region
          %s100 = smul.u32 2, %s18
          %p101 = scmp.lt.s32.totalorder %s17, 1
          %s102 = scalar_select %p101, %s17, 1
          %p103 = scmp.lt.s32.totalorder %s100, 1
          %s104 = scalar_select %p103, %s100, 1
          %s105 = smul.addr %s102, 2
          %s106 = sadd.s32 %s104, %s105
          %s107 = smul.addr %s106, 4
          %s108 = scalar_lea.vmem %s0, %s107
          %s109 = smul.u32 2, %s18
        $region20: #{tpu_custom_call.1} parent=15 // pred_fallthru
          _
      $region16: #{tpu_custom_call.1} parent=5 // pred_fallthru
        _
      %p110 = scmp.le.s32.totalorder 1, %s10
      %p111 = scmp.lt.s32.totalorder %s10, 3
      %p112 = pnand %p110, %p111
      %p113 = pneg %p112
      // Predicated region
      $region21: #{tpu_custom_call.1} parent=5 // pred_check
        _
      $region22: #{tpu_custom_call.1} parent=5 // pred_check_branch
        %115 = sbr.rel (%p112) target = $region24
      $region23: #{tpu_custom_call.1} parent=5 // pred_region
        %s116 = ssub.s32 %s10, 1
        %s117 = smul.u32 2, %s20
        %p118 = scmp.lt.s32.totalorder %s19, 1
        %s119 = scalar_select %p118, %s19, 1
        %p120 = scmp.lt.s32.totalorder %s117, 1
        %s121 = scalar_select %p120, %s117, 1
        %s122 = smul.addr %s119, 2
        %s123 = sadd.s32 %s121, %s122
        %s124 = smul.addr %s123, 4
        %s125 = scalar_lea.vmem %s0, %s124
        %p126 = pneg %p50
        %p127 = pneg %p47
        %p128 = pneg %p78
        %p129 = pneg %p75
        %s130 = sand.u32 %s65, 1
        %s131 = scalar_lea.sflag [#allocation3], %s130
        %s132 = sand.u32 %s65, 1
        %s133 = smul.addr %s132, 2
        %s134 = scalar_lea.vmem [#allocation2], %s133
        %s135 = smul.u32 2, %s20
        %p136 = scmp.lt.s32.totalorder %s19, 1
        %s137 = scalar_select %p136, %s19, 1
        %p138 = scmp.lt.s32.totalorder %s135, 1
        %s139 = scalar_select %p138, %s135, 1
        %s140 = smul.addr %s137, 2
        %s141 = sadd.s32 %s139, %s140
        %s142 = smul.addr %s141, 4
        %s143 = scalar_lea.vmem %s0, %s142
        %s144 = smul.u32 2, %s20
        %s145 = smul.u32 2, %s20
        %v146 = vld [vmem:[%s143] sm:$0x77]
        %v147 = vmul.f32 %v146, 0.100401424
        %v148 = vmul.f32 %v146, -0.058871638
        %v150 = vrot.slane %v148, 5
        %v151 = vrot.slane %v150, 4
        %v153 = vadd.f32 %v147, %v151
        %v154 = vmul.f32 %v146, -0.24833103
        %v156 = vrot.slane %v154, 6
        %v157 = vrot.slane %v156, 4
        %v159 = vadd.f32 %v153, %v157
        %v160 = vadd.f32 %v159, 0.0
        %v161 = vmax.f32 %v160, 0.0
        %v162 = vmul.f32 %v161, -0.24424557
        %v163 = vadd.f32 %v162, 0.0
        %v164 = vmul.f32 %v146, -0.09063372
        %v165 = vmul.f32 %v146, 0.21469851
        %v167 = vrot.slane %v165, 5
        %v168 = vrot.slane %v167, 4
        %v170 = vadd.f32 %v164, %v168
        %v171 = vmul.f32 %v146, -0.07149639
        %v173 = vrot.slane %v171, 6
        %v174 = vrot.slane %v173, 4
        %v176 = vadd.f32 %v170, %v174
        %v177 = vadd.f32 %v176, 0.0
        %v178 = vmax.f32 %v177, 0.0
        %v179 = vmul.f32 %v178, -0.20356806
        %v180 = vadd.f32 %v163, %v179
        %v181 = vmul.f32 %v146, -0.074817225
        %v182 = vmul.f32 %v146, 0.080188036
        %v184 = vrot.slane %v182, 5
        %v185 = vrot.slane %v184, 4
        %v187 = vadd.f32 %v181, %v185
        %v188 = vmul.f32 %v146, -0.01874304
        %v190 = vrot.slane %v188, 6
        %v191 = vrot.slane %v190, 4
        %v193 = vadd.f32 %v187, %v191
        %v194 = vadd.f32 %v193, 0.0
        %v195 = vmax.f32 %v194, 0.0
        %v196 = vmul.f32 %v195, 0.020554423
        %v197 = vadd.f32 %v180, %v196
        %v198 = vmul.f32 %v146, -0.117136694
        %v199 = vmul.f32 %v146, -0.019745428
        %v201 = vrot.slane %v199, 5
        %v202 = vrot.slane %v201, 4
        %v204 = vadd.f32 %v198, %v202
        %v205 = vmul.f32 %v146, 0.23848474
        %v207 = vrot.slane %v205, 6
        %v208 = vrot.slane %v207, 4
        %v210 = vadd.f32 %v204, %v208
        %v211 = vadd.f32 %v210, 0.0
        %v212 = vmax.f32 %v211, 0.0
        %v213 = vmul.f32 %v212, -0.03535502
        %v214 = vadd.f32 %v197, %v213
        %v215 = vmul.f32 %v146, -0.08712328
        %v216 = vmul.f32 %v146, -0.17398049
        %v218 = vrot.slane %v216, 5
        %v219 = vrot.slane %v218, 4
        %v221 = vadd.f32 %v215, %v219
        %v222 = vmul.f32 %v146, -0.17960398
        %v224 = vrot.slane %v222, 6
        %v225 = vrot.slane %v224, 4
        %v227 = vadd.f32 %v221, %v225
        %v228 = vadd.f32 %v227, 0.0
        %v229 = vmax.f32 %v228, 0.0
        %v230 = vmul.f32 %v229, -0.07619741
        %v231 = vadd.f32 %v214, %v230
        %v232 = vmul.f32 %v146, 0.058883812
        %v233 = vmul.f32 %v146, -0.08214191
        %v235 = vrot.slane %v233, 5
        %v236 = vrot.slane %v235, 4
        %v238 = vadd.f32 %v232, %v236
        %v239 = vmul.f32 %v146, -0.10363126
        %v241 = vrot.slane %v239, 6
        %v242 = vrot.slane %v241, 4
        %v244 = vadd.f32 %v238, %v242
        %v245 = vadd.f32 %v244, 0.0
        %v246 = vmax.f32 %v245, 0.0
        %v247 = vmul.f32 %v246, -0.117855184
        %v248 = vadd.f32 %v231, %v247
        %v249 = vmul.f32 %v146, 0.07239299
        %v250 = vmul.f32 %v146, -0.23626772
        %v252 = vrot.slane %v250, 5
        %v253 = vrot.slane %v252, 4
        %v255 = vadd.f32 %v249, %v253
        %v256 = vmul.f32 %v146, -0.12680145
        %v258 = vrot.slane %v256, 6
        %v259 = vrot.slane %v258, 4
        %v261 = vadd.f32 %v255, %v259
        %v262 = vadd.f32 %v261, 0.0
        %v263 = vmax.f32 %v262, 0.0
        %v264 = vmul.f32 %v263, -0.11482196
        %v265 = vadd.f32 %v248, %v264
        %v266 = vmul.f32 %v146, -0.10255982
        %v267 = vmul.f32 %v146, 0.15526493
        %v269 = vrot.slane %v267, 5
        %v270 = vrot.slane %v269, 4
        %v272 = vadd.f32 %v266, %v270
        %v273 = vmul.f32 %v146, -0.15007629
        %v275 = vrot.slane %v273, 6
        %v276 = vrot.slane %v275, 4
        %v278 = vadd.f32 %v272, %v276
        %v279 = vadd.f32 %v278, 0.0
        %v280 = vmax.f32 %v279, 0.0
        %v281 = vmul.f32 %v280, 0.02971658
        %v282 = vadd.f32 %v265, %v281
        %v283 = vmul.f32 %v146, 0.1661628
        %v284 = vmul.f32 %v146, 0.1405427
        %v286 = vrot.slane %v284, 5
        %v287 = vrot.slane %v286, 4
        %v289 = vadd.f32 %v283, %v287
        %v290 = vmul.f32 %v146, 0.00852168
        %v292 = vrot.slane %v290, 6
        %v293 = vrot.slane %v292, 4
        %v295 = vadd.f32 %v289, %v293
        %v296 = vadd.f32 %v295, 0.0
        %v297 = vmax.f32 %v296, 0.0
        %v298 = vmul.f32 %v297, -0.1310536
        %v299 = vadd.f32 %v282, %v298
        %v300 = vmul.f32 %v146, -0.18910252
        %v301 = vmul.f32 %v146, 0.035037924
        %v303 = vrot.slane %v301, 5
        %v304 = vrot.slane %v303, 4
        %v306 = vadd.f32 %v300, %v304
        %v307 = vmul.f32 %v146, 0.18014993
        %v309 = vrot.slane %v307, 6
        %v310 = vrot.slane %v309, 4
        %v312 = vadd.f32 %v306, %v310
        %v313 = vadd.f32 %v312, 0.0
        %v314 = vmax.f32 %v313, 0.0
        %v315 = vmul.f32 %v314, 0.21302025
        %v316 = vadd.f32 %v299, %v315
        %v317 = vmul.f32 %v146, -0.12889339
        %v318 = vmul.f32 %v146, 0.0062463074
        %v320 = vrot.slane %v318, 5
        %v321 = vrot.slane %v320, 4
        %v323 = vadd.f32 %v317, %v321
        %v324 = vmul.f32 %v146, 0.1277699
        %v326 = vrot.slane %v324, 6
        %v327 = vrot.slane %v326, 4
        %v329 = vadd.f32 %v323, %v327
        %v330 = vadd.f32 %v329, 0.0
        %v331 = vmax.f32 %v330, 0.0
        %v332 = vmul.f32 %v331, -0.018957235
        %v333 = vadd.f32 %v316, %v332
        %v334 = vmul.f32 %v146, 0.013360691
        %v335 = vmul.f32 %v146, 0.114703886
        %v337 = vrot.slane %v335, 5
        %v338 = vrot.slane %v337, 4
        %v340 = vadd.f32 %v334, %v338
        %v341 = vmul.f32 %v146, 0.049219385
        %v343 = vrot.slane %v341, 6
        %v344 = vrot.slane %v343, 4
        %v346 = vadd.f32 %v340, %v344
        %v347 = vadd.f32 %v346, 0.0
        %v348 = vmax.f32 %v347, 0.0
        %v349 = vmul.f32 %v348, 0.096401215
        %v350 = vadd.f32 %v333, %v349
        %v351 = vmul.f32 %v146, -0.115303926
        %v352 = vmul.f32 %v146, -0.021245524
        %v354 = vrot.slane %v352, 5
        %v355 = vrot.slane %v354, 4
        %v357 = vadd.f32 %v351, %v355
        %v358 = vmul.f32 %v146, 0.052948255
        %v360 = vrot.slane %v358, 6
        %v361 = vrot.slane %v360, 4
        %v363 = vadd.f32 %v357, %v361
        %v364 = vadd.f32 %v363, 0.0
        %v365 = vmax.f32 %v364, 0.0
        %v366 = vmul.f32 %v365, -0.13011001
        %v367 = vadd.f32 %v350, %v366
        %v368 = vmul.f32 %v146, 0.02392963
        %v369 = vmul.f32 %v146, -0.03396749
        %v371 = vrot.slane %v369, 5
        %v372 = vrot.slane %v371, 4
        %v374 = vadd.f32 %v368, %v372
        %v375 = vmul.f32 %v146, 0.06909431
        %v377 = vrot.slane %v375, 6
        %v378 = vrot.slane %v377, 4
        %v380 = vadd.f32 %v374, %v378
        %v381 = vadd.f32 %v380, 0.0
        %v382 = vmax.f32 %v381, 0.0
        %v383 = vmul.f32 %v382, -0.07486939
        %v384 = vadd.f32 %v367, %v383
        %v385 = vmul.f32 %v146, 0.17448074
        %v386 = vmul.f32 %v146, 0.06888535
        %v388 = vrot.slane %v386, 5
        %v389 = vrot.slane %v388, 4
        %v391 = vadd.f32 %v385, %v389
        %v392 = vmul.f32 %v146, 0.0848079
        %v394 = vrot.slane %v392, 6
        %v395 = vrot.slane %v394, 4
        %v397 = vadd.f32 %v391, %v395
        %v398 = vadd.f32 %v397, 0.0
        %v399 = vmax.f32 %v398, 0.0
        %v400 = vmul.f32 %v399, -0.037299838
        %v401 = vadd.f32 %v384, %v400
        %v402 = vmul.f32 %v146, 0.05050189
        %v403 = vmul.f32 %v146, -0.033923876
        %v405 = vrot.slane %v403, 5
        %v406 = vrot.slane %v405, 4
        %v408 = vadd.f32 %v402, %v406
        %v409 = vmul.f32 %v146, -0.012829
        %v411 = vrot.slane %v409, 6
        %v412 = vrot.slane %v411, 4
        %v414 = vadd.f32 %v408, %v412
        %v415 = vadd.f32 %v414, 0.0
        %v416 = vmax.f32 %v415, 0.0
        %v417 = vmul.f32 %v416, 0.04427907
        %v418 = vadd.f32 %v401, %v417
        %v419 = vmul.f32 %v146, 0.059505302
        %v420 = vmul.f32 %v146, 0.04920053
        %v422 = vrot.slane %v420, 5
        %v423 = vrot.slane %v422, 4
        %v425 = vadd.f32 %v419, %v423
        %v426 = vmul.f32 %v146, -0.066875294
        %v428 = vrot.slane %v426, 6
        %v429 = vrot.slane %v428, 4
        %v431 = vadd.f32 %v425, %v429
        %v432 = vadd.f32 %v431, 0.0
        %v433 = vmax.f32 %v432, 0.0
        %v434 = vmul.f32 %v433, -0.119029954
        %v435 = vadd.f32 %v418, %v434
        %v436 = vmul.f32 %v146, -0.04728381
        %v437 = vmul.f32 %v146, 0.021159483
        %v439 = vrot.slane %v437, 5
        %v440 = vrot.slane %v439, 4
        %v442 = vadd.f32 %v436, %v440
        %v443 = vmul.f32 %v146, 0.14898597
        %v445 = vrot.slane %v443, 6
        %v446 = vrot.slane %v445, 4
        %v448 = vadd.f32 %v442, %v446
        %v449 = vadd.f32 %v448, 0.0
        %v450 = vmax.f32 %v449, 0.0
        %v451 = vmul.f32 %v450, -0.006925564
        %v452 = vadd.f32 %v435, %v451
        %v453 = vmul.f32 %v146, 0.091563754
        %v454 = vmul.f32 %v146, -0.18126069
        %v456 = vrot.slane %v454, 5
        %v457 = vrot.slane %v456, 4
        %v459 = vadd.f32 %v453, %v457
        %v460 = vmul.f32 %v146, -0.016449748
        %v462 = vrot.slane %v460, 6
        %v463 = vrot.slane %v462, 4
        %v465 = vadd.f32 %v459, %v463
        %v466 = vadd.f32 %v465, 0.0
        %v467 = vmax.f32 %v466, 0.0
        %v468 = vmul.f32 %v467, -0.09560589
        %v469 = vadd.f32 %v452, %v468
        %v470 = vmul.f32 %v146, 0.03612034
        %v471 = vmul.f32 %v146, 0.18841706
        %v473 = vrot.slane %v471, 5
        %v474 = vrot.slane %v473, 4
        %v476 = vadd.f32 %v470, %v474
        %v477 = vmul.f32 %v146, -0.17862996
        %v479 = vrot.slane %v477, 6
        %v480 = vrot.slane %v479, 4
        %v482 = vadd.f32 %v476, %v480
        %v483 = vadd.f32 %v482, 0.0
        %v484 = vmax.f32 %v483, 0.0
        %v485 = vmul.f32 %v484, -0.19587639
        %v486 = vadd.f32 %v469, %v485
        %v487 = vmul.f32 %v146, -0.06341644
        %v488 = vmul.f32 %v146, 0.084517725
        %v490 = vrot.slane %v488, 5
        %v491 = vrot.slane %v490, 4
        %v493 = vadd.f32 %v487, %v491
        %v494 = vmul.f32 %v146, -0.06098333
        %v496 = vrot.slane %v494, 6
        %v497 = vrot.slane %v496, 4
        %v499 = vadd.f32 %v493, %v497
        %v500 = vadd.f32 %v499, 0.0
        %v501 = vmax.f32 %v500, 0.0
        %v502 = vmul.f32 %v501, -0.11059942
        %v503 = vadd.f32 %v486, %v502
        %v504 = vmul.f32 %v146, -0.087049104
        %v505 = vmul.f32 %v146, 0.16877823
        %v507 = vrot.slane %v505, 5
        %v508 = vrot.slane %v507, 4
        %v510 = vadd.f32 %v504, %v508
        %v511 = vmul.f32 %v146, 0.18890719
        %v513 = vrot.slane %v511, 6
        %v514 = vrot.slane %v513, 4
        %v516 = vadd.f32 %v510, %v514
        %v517 = vadd.f32 %v516, 0.0
        %v518 = vmax.f32 %v517, 0.0
        %v519 = vmul.f32 %v518, -0.032200523
        %v520 = vadd.f32 %v503, %v519
        %v521 = vmul.f32 %v146, 0.0758388
        %v522 = vmul.f32 %v146, 0.16461895
        %v524 = vrot.slane %v522, 5
        %v525 = vrot.slane %v524, 4
        %v527 = vadd.f32 %v521, %v525
        %v528 = vmul.f32 %v146, -0.037285555
        %v530 = vrot.slane %v528, 6
        %v531 = vrot.slane %v530, 4
        %v533 = vadd.f32 %v527, %v531
        %v534 = vadd.f32 %v533, 0.0
        %v535 = vmax.f32 %v534, 0.0
        %v536 = vmul.f32 %v535, 0.13303299
        %v537 = vadd.f32 %v520, %v536
        %v538 = vmul.f32 %v146, 0.10628535
        %v539 = vmul.f32 %v146, -0.077160336
        %v541 = vrot.slane %v539, 5
        %v542 = vrot.slane %v541, 4
        %v544 = vadd.f32 %v538, %v542
        %v545 = vmul.f32 %v146, 0.26885042
        %v547 = vrot.slane %v545, 6
        %v548 = vrot.slane %v547, 4
        %v550 = vadd.f32 %v544, %v548
        %v551 = vadd.f32 %v550, 0.0
        %v552 = vmax.f32 %v551, 0.0
        %v553 = vmul.f32 %v552, 0.08122369
        %v554 = vadd.f32 %v537, %v553
        %v555 = vmul.f32 %v146, 0.09083565
        %v556 = vmul.f32 %v146, 0.120864585
        %v558 = vrot.slane %v556, 5
        %v559 = vrot.slane %v558, 4
        %v561 = vadd.f32 %v555, %v559
        %v562 = vmul.f32 %v146, -0.05242611
        %v564 = vrot.slane %v562, 6
        %v565 = vrot.slane %v564, 4
        %v567 = vadd.f32 %v561, %v565
        %v568 = vadd.f32 %v567, 0.0
        %v569 = vmax.f32 %v568, 0.0
        %v570 = vmul.f32 %v569, -0.11588239
        %v571 = vadd.f32 %v554, %v570
        %v572 = vmul.f32 %v146, -0.049232017
        %v573 = vmul.f32 %v146, -0.0971194
        %v575 = vrot.slane %v573, 5
        %v576 = vrot.slane %v575, 4
        %v578 = vadd.f32 %v572, %v576
        %v579 = vmul.f32 %v146, 0.13727717
        %v581 = vrot.slane %v579, 6
        %v582 = vrot.slane %v581, 4
        %v584 = vadd.f32 %v578, %v582
        %v585 = vadd.f32 %v584, 0.0
        %v586 = vmax.f32 %v585, 0.0
        %v587 = vmul.f32 %v586, -0.05432413
        %v588 = vadd.f32 %v571, %v587
        %v589 = vmul.f32 %v146, 0.08884921
        %v590 = vmul.f32 %v146, 0.10709566
        %v592 = vrot.slane %v590, 5
        %v593 = vrot.slane %v592, 4
        %v595 = vadd.f32 %v589, %v593
        %v596 = vmul.f32 %v146, -0.08181789
        %v598 = vrot.slane %v596, 6
        %v599 = vrot.slane %v598, 4
        %v601 = vadd.f32 %v595, %v599
        %v602 = vadd.f32 %v601, 0.0
        %v603 = vmax.f32 %v602, 0.0
        %v604 = vmul.f32 %v603, 0.08078304
        %v605 = vadd.f32 %v588, %v604
        %v606 = vmul.f32 %v146, 0.16453908
        %v607 = vmul.f32 %v146, -0.017719282
        %v609 = vrot.slane %v607, 5
        %v610 = vrot.slane %v609, 4
        %v612 = vadd.f32 %v606, %v610
        %v613 = vmul.f32 %v146, 0.11753315
        %v615 = vrot.slane %v613, 6
        %v616 = vrot.slane %v615, 4
        %v618 = vadd.f32 %v612, %v616
        %v619 = vadd.f32 %v618, 0.0
        %v620 = vmax.f32 %v619, 0.0
        %v621 = vmul.f32 %v620, 0.16546044
        %v622 = vadd.f32 %v605, %v621
        %v623 = vmul.f32 %v146, -0.2515866
        %v624 = vmul.f32 %v146, 0.08637278
        %v626 = vrot.slane %v624, 5
        %v627 = vrot.slane %v626, 4
        %v629 = vadd.f32 %v623, %v627
        %v630 = vmul.f32 %v146, 0.033238705
        %v632 = vrot.slane %v630, 6
        %v633 = vrot.slane %v632, 4
        %v635 = vadd.f32 %v629, %v633
        %v636 = vadd.f32 %v635, 0.0
        %v637 = vmax.f32 %v636, 0.0
        %v638 = vmul.f32 %v637, -0.040930986
        %v639 = vadd.f32 %v622, %v638
        %v640 = vmul.f32 %v146, 0.04417807
        %v641 = vmul.f32 %v146, 0.040520158
        %v643 = vrot.slane %v641, 5
        %v644 = vrot.slane %v643, 4
        %v646 = vadd.f32 %v640, %v644
        %v647 = vmul.f32 %v146, 0.014422475
        %v649 = vrot.slane %v647, 6
        %v650 = vrot.slane %v649, 4
        %v652 = vadd.f32 %v646, %v650
        %v653 = vadd.f32 %v652, 0.0
        %v654 = vmax.f32 %v653, 0.0
        %v655 = vmul.f32 %v654, 0.0053888448
        %v656 = vadd.f32 %v639, %v655
        %v657 = vmul.f32 %v146, 0.18173127
        %v658 = vmul.f32 %v146, -0.06208841
        %v660 = vrot.slane %v658, 5
        %v661 = vrot.slane %v660, 4
        %v663 = vadd.f32 %v657, %v661
        %v664 = vmul.f32 %v146, 0.18538128
        %v666 = vrot.slane %v664, 6
        %v667 = vrot.slane %v666, 4
        %v669 = vadd.f32 %v663, %v667
        %v670 = vadd.f32 %v669, 0.0
        %v671 = vmax.f32 %v670, 0.0
        %v672 = vmul.f32 %v671, -0.06483882
        %v673 = vadd.f32 %v656, %v672
        %v674 = vmul.f32 %v146, -0.117313884
        %v675 = vmul.f32 %v146, 0.023039393
        %v677 = vrot.slane %v675, 5
        %v678 = vrot.slane %v677, 4
        %v680 = vadd.f32 %v674, %v678
        %v681 = vmul.f32 %v146, -0.040060733
        %v683 = vrot.slane %v681, 6
        %v684 = vrot.slane %v683, 4
        %v686 = vadd.f32 %v680, %v684
        %v687 = vadd.f32 %v686, 0.0
        %v688 = vmax.f32 %v687, 0.0
        %v689 = vmul.f32 %v688, -0.17675957
        %v690 = vadd.f32 %v673, %v689
        %v691 = vxor.u32 %v690, 2147483648
        %v692 = vmul.f32 %v691, 1.442695
        %v693 = vpow.pop %v692
        %v694 = vadd.f32 %v693, 1.0
        %v695 = vrcp.pop %v694
        %v696 = vmul.f32 %v694, %v695
        %v697 = vsub.f32 1.0, %v696
        %v698 = vmul.f32 %v695, %v697
        %v699 = vadd.f32 %v695, %v698
        %vm700 = vweird.f32 %v694
        %vm701 = vweird.f32 %v695
        %vm702 = vmor %vm700, %vm701
        %v703 = vsel %vm702, %v695, %v699
        %v704 = vand.u32 2147483647, %v694
        %vm705 = vcmp.eq.f32.partialorder %v704, 8.507059e+37
        %v706 = vand.u32 %v694, 2147483648
        %v707 = vor.u32 1.1754944e-38, %v706
        %v708 = vsel %vm705, %v707, %v703
        %v709 = vmul.f32 1.0, %v708
        %v711 = vrot.slane %v709, 3
        %vm712 = vcmask 1040384
        %v713 = vsel %vm712, %v709, %v711
        %v715 = vlaneseq
        %vm716 = vcmp.ge.s32.totalorder %v715, 0
        %vm717 = vcmp.lt.s32.totalorder %v715, 256
        %vm718 = vmand %vm716, %vm717
        %719 = vst.msk [vmem:[%s134] sm:$0x3] %vm718, %v713
        %s720 = sand.u32 %s65, 1
        %s721 = scalar_lea.sflag [#allocation3], %s720
        %s722 = sand.u32 %s65, 1
        %s723 = smul.addr %s722, 2
        %s724 = scalar_lea.vmem [#allocation2], %s723
        // Predicated region
        $region25: #{tpu_custom_call.1} parent=23 // pred_check
          %p725 = pneg %p75
        $region26: #{tpu_custom_call.1} parent=23 // pred_check_branch
          %727 = sbr.rel (%p725) target = $region28
        $region27: #{tpu_custom_call.1} parent=23 // pred_region
          %s728 = smul.u32 2, %s20
          %730 = vsyncadd %s721, 0
          %s731 = smul.addr %s19, 2
          %s732 = sadd.s32 %s728, %s731
          %s733 = scalar_lea.hbm %s1, %s732
          %s735 = sshll.u32 %s724, 4
          %s736 = int_to_ptr.vmem [resolvable:$true] %s735
          %s737 = sshll.u32 %s733, 4
          %s738 = int_to_ptr.hbm [resolvable:$true] %s737
          %740 = dma.vmem_to_hbm [thread:$0]  %s736, 32, %s738, %s721
        $region28: #{tpu_custom_call.1} parent=23 // pred_fallthru
          _
      $region24: #{tpu_custom_call.1} parent=5 // pred_fallthru
        _
      %p741 = scmp.le.s32.totalorder 2, %s10
      // Predicated region
      $region29: #{tpu_custom_call.1} parent=5 // pred_check
        %p742 = pneg %p741
      $region30: #{tpu_custom_call.1} parent=5 // pred_check_branch
        %744 = sbr.rel (%p742) target = $region32
      $region31: #{tpu_custom_call.1} parent=5 // pred_region
        %s745 = ssub.s32 %s10, 2
        // Predicated region
        $region33: #{tpu_custom_call.1} parent=31 // pred_check
          %p746 = pneg %p81
        $region34: #{tpu_custom_call.1} parent=31 // pred_check_branch
          %748 = sbr.rel (%p746) target = $region36
        $region35: #{tpu_custom_call.1} parent=31 // pred_region
          %s749 = sand.u32 %s66, 1
          %s750 = scalar_lea.sflag [#allocation3], %s749
          %s751 = sand.u32 %s66, 1
          %s752 = smul.addr %s751, 2
          %s753 = scalar_lea.vmem [#allocation2], %s752
          %755 = dma.done %s750, 32
        $region36: #{tpu_custom_call.1} parent=31 // pred_fallthru
          _
      $region32: #{tpu_custom_call.1} parent=5 // pred_fallthru
        _
    $region6: #{tpu_custom_call.1} parent=1 // loop_footer
      %s14 = sadd.s32 1, %s10
    $region7: #{tpu_custom_call.1} parent=1 // loop_footer_branch
      %9 = sbr.rel target = $region3
    $region8: #{tpu_custom_call.1} parent=1 // loop_exit
      _
    %756 = vsyncpa [#allocation3], 1
    %s757 = scalar_lea.sflag [#allocation3], 1
    %758 = vsyncpa %s757, 1

</llo_original>
